<compile_context>
chip_gen: v5e
topology: v5e:2x2
jax: 0.10.0
libtpu: 0.0.40
codegen_flags: <defaults>
</compile_context>

<pallas_src>
import math

import jax
import jax.numpy as jnp
from jax.experimental import pallas as pl
from jax.experimental.pallas import tpu as pltpu


# ---------------------------------------------------------------------------
# Kernel bodies
# ---------------------------------------------------------------------------


def _transh_math(head, rel, tail):
    """Shared TransH math on lane-dense [K, T] tiles -> [1, T] distances."""
    # nn.Embedding(max_norm=1) lookup-time renorm: rows with L2 norm > 1 are
    # scaled back to unit norm.  Compare on the squared norm and use rsqrt
    # (EUP slot); differs from the reference's 1/(norm + 1e-7) by ~1e-7 rel.
    head_sq = jnp.sum(head * head, axis=0, keepdims=True)           # [1, T]
    head = head * jnp.where(head_sq > 1.0, jax.lax.rsqrt(head_sq), 1.0)
    tail_sq = jnp.sum(tail * tail, axis=0, keepdims=True)           # [1, T]
    tail = tail * jnp.where(tail_sq > 1.0, jax.lax.rsqrt(tail_sq), 1.0)

    # hyper_head + rel - hyper_tail == d + rel * (1 - <d, rel>),  d = head-tail
    d = head - tail                                                  # [K, T]
    s = jnp.sum(d * rel, axis=0, keepdims=True)                      # [1, T]
    diff = d + rel * (1.0 - s)                                       # [K, T]
    return jnp.sqrt(jnp.sum(diff * diff, axis=0, keepdims=True))     # [1, T]


def _transh_fused_kernel(idx_ref, ent_t_ref, rel_t_ref, out_ref):
    """Fused-gather kernel.

    idx_ref:   int32 [3, T]      (head_id / rel_id / tail_id rows, per tile)
    ent_t_ref: f32   [K, N_ent]  (transposed table, VMEM-resident: constant map)
    rel_t_ref: f32   [K, N_rel]
    out_ref:   f32   [1, T]
    """
    ent_t = ent_t_ref[...]
    rel_t = rel_t_ref[...]
    n_ent = ent_t.shape[1]
    n_rel = rel_t.shape[1]
    t = idx_ref.shape[1]

    def gather(table_t, row, n):
        # One-hot [n, T] built from a 2-D iota, then [K, n] x [n, T] on the
        # otherwise idle MXU -> lane-dense [K, T] gathered embeddings.
        iota = jax.lax.broadcasted_iota(jnp.int32, (n, t), 0)
        onehot = (iota == row).astype(jnp.float32)
        return jnp.dot(table_t, onehot, preferred_element_type=jnp.float32)

    head = gather(ent_t, idx_ref[0:1, :], n_ent)   # [K, T]
    rel = gather(rel_t, idx_ref[1:2, :], n_rel)    # [K, T]
    tail = gather(ent_t, idx_ref[2:3, :], n_ent)   # [K, T]

    out_ref[...] = _transh_math(head, rel, tail)


def _transh_gathered_kernel(emb_ref, out_ref):
    """Fallback kernel: emb_ref is a stacked, lane-dense f32 [3, K, T] block."""
    out_ref[...] = _transh_math(emb_ref[0], emb_ref[1], emb_ref[2])


# ---------------------------------------------------------------------------
# Wrapper
# ---------------------------------------------------------------------------


def _round_up_128(n):
    return ((max(int(n), 1) + 127) // 128) * 128


def _pick_batch_tile(b):
    """Auto tile: <=4096 lanes, >=2 grid steps when B allows, no waste for small B."""
    if b <= 256:
        return _round_up_128(b)
    # >= 2 grid steps so v7x's two TensorCores both get work; cap the tile so
    # per-step DMA amortizes the ~0.35us step overhead without scaling VMEM
    # with B (keeps v5e's scoped-VMEM headroom).
    return min(4096, _round_up_128(-(-b // 2)))


def _fits_fused(n_ent, n_rel, k, tile):
    """Use the fused in-kernel gather only when tables + one-hots fit VMEM."""
    table_bytes = (n_ent + n_rel) * k * 4
    onehot_bytes = max(n_ent, n_rel) * tile * 4
    return table_bytes <= (2 << 20) and onehot_bytes <= (4 << 20)


def transh_forward(x, entity_emb, rel_emb, *, batch_tile=None, use_fused=None):
    """x: [B, 3] int32 triples (head_id, rel_id, tail_id) -> [B] f32 distances."""
    x = x.astype(jnp.int32)
    B = x.shape[0]
    n_ent, K = entity_emb.shape
    n_rel = rel_emb.shape[0]

    tile = int(batch_tile) if batch_tile is not None else _pick_batch_tile(B)
    assert tile % 128 == 0, "batch_tile must be a multiple of 128 (lane width)"
    num_tiles = -(-B // tile)
    b_pad = num_tiles * tile
    if b_pad != B:
        # Pad with index-0 triples; padded outputs are sliced off below.
        x = jnp.pad(x, ((0, b_pad - B), (0, 0)))

    if use_fused is None:
        use_fused = _fits_fused(n_ent, n_rel, K, tile)

    cparams = pltpu.CompilerParams(
        dimension_semantics=("parallel",),
        # Raises v5e's 16 MiB scoped default; matches v6e/v7x. Usage is small.
        vmem_limit_bytes=32 * 1024 * 1024,
    )
    out_spec = pl.BlockSpec((1, tile), lambda i: (0, i))
    out_shape = jax.ShapeDtypeStruct((1, b_pad), jnp.float32)

    if use_fused:
        # In-kernel gather: only indices stream from HBM; tables stay resident
        # in VMEM (constant index_map -> fetched once, not per grid step).
        idx = x.T                    # [3, b_pad] int32
        ent_t = entity_emb.T         # [K, n_ent] lane-dense table
        rel_t = rel_emb.T            # [K, n_rel]
        out = pl.pallas_call(
            _transh_fused_kernel,
            out_shape=out_shape,
            grid_spec=pltpu.PrefetchScalarGridSpec(
                num_scalar_prefetch=0,
                grid=(num_tiles,),
                in_specs=[
                    pl.BlockSpec((3, tile), lambda i: (0, i)),
                    pl.BlockSpec((K, n_ent), lambda i: (0, 0)),
                    pl.BlockSpec((K, n_rel), lambda i: (0, 0)),
                ],
                out_specs=out_spec,
            ),
            compiler_params=cparams,
        )(idx, ent_t, rel_t)
    else:
        # Fallback: XLA gather from pre-transposed tables (streams produced
        # already lane-dense, no materialized HBM transpose), stacked so each
        # grid step is a single [3, K, tile] DMA.
        ent_t = entity_emb.T
        rel_t = rel_emb.T
        emb = jnp.stack(
            [
                jnp.take(ent_t, x[:, 0], axis=1),   # head  [K, b_pad]
                jnp.take(rel_t, x[:, 1], axis=1),   # rel   [K, b_pad]
                jnp.take(ent_t, x[:, 2], axis=1),   # tail  [K, b_pad]
            ],
            axis=0,
        )  # [3, K, b_pad]
        out = pl.pallas_call(
            _transh_gathered_kernel,
            out_shape=out_shape,
            grid_spec=pltpu.PrefetchScalarGridSpec(
                num_scalar_prefetch=0,
                grid=(num_tiles,),
                in_specs=[pl.BlockSpec((3, K, tile), lambda i: (0, 0, i))],
                out_specs=out_spec,
            ),
            compiler_params=cparams,
        )(emb)

    return out[0, :B]


# ---------------------------------------------------------------------------
# Parameter init / reference / test harness
# ---------------------------------------------------------------------------


def init_params(key, num_entities, num_rels, k):
    """Deterministic synthetic parameters mirroring TranshModel.__init__."""
    bound = 6.0 / math.sqrt(k)
    k_ent, k_rel, k_hyp = jax.random.split(key, 3)

    entity_emb = jax.random.uniform(
        k_ent, (num_entities, k), minval=-bound, maxval=bound, dtype=jnp.float32
    )

    rel_emb = jax.random.uniform(
        k_rel, (num_rels, k), minval=-bound, maxval=bound, dtype=jnp.float32
    )
    rel_emb = rel_emb / jnp.linalg.norm(rel_emb, ord=2, axis=1, keepdims=True)

    # Hyperplane embeddings exist in the module but are unused in forward().
    hyperplane_emb = jax.random.uniform(
        k_hyp, (num_rels, k), minval=-bound, maxval=bound, dtype=jnp.float32
    )
    return entity_emb, rel_emb, hyperplane_emb


def _reference_forward(x, entity_emb, rel_emb):
    head = entity_emb[x[:, 0]]
    rel = rel_emb[x[:, 1]]
    tail = entity_emb[x[:, 2]]
    hn = jnp.linalg.norm(head, axis=1, keepdims=True)
    head = head * jnp.where(hn > 1.0, 1.0 / (hn + 1e-7), 1.0)
    tn = jnp.linalg.norm(tail, axis=1, keepdims=True)
    tail = tail * jnp.where(tn > 1.0, 1.0 / (tn + 1e-7), 1.0)
    hyper_rel = rel
    hyper_head = head - hyper_rel * jnp.sum(head * hyper_rel, axis=1, keepdims=True)
    hyper_tail = tail - hyper_rel * jnp.sum(tail * hyper_rel, axis=1, keepdims=True)
    return jnp.sqrt(jnp.sum((hyper_head + rel - hyper_tail) ** 2, axis=1))


def _make_batch(key, batch, num_entities, num_rels):
    k_h, k_r, k_t = jax.random.split(key, 3)
    heads = jax.random.randint(k_h, (batch,), 0, num_entities)
    rels = jax.random.randint(k_r, (batch,), 0, num_rels)
    tails = jax.random.randint(k_t, (batch,), 0, num_entities)
    return jnp.stack([heads, rels, tails], axis=1).astype(jnp.int32)


if __name__ == "__main__":
    num_entities, num_rels, k = 16, 8, 32

    key = jax.random.PRNGKey(0)
    k_params, _ = jax.random.split(key, 2)
    entity_emb, rel_emb, _ = init_params(k_params, num_entities, num_rels, k)

    def check(batch, data_key, **kw):
        x = _make_batch(data_key, batch, num_entities, num_rels)
        out = jax.block_until_ready(transh_forward(x, entity_emb, rel_emb, **kw))
        ref = _reference_forward(x, entity_emb, rel_emb)
        assert out.shape == (batch,)
        # MXU f32 matmuls run as multi-pass bf16 internally, so the one-hot
        # gather carries ~1e-6-level error; well inside 1e-4.
        assert jnp.allclose(out, ref, atol=1e-4, rtol=1e-4), float(
            jnp.max(jnp.abs(out - ref))
        )

    # Fused in-kernel gather, small batch (tile clamped to 128, 1 grid step).
    check(8, jax.random.PRNGKey(1))
    # Fused gather, ragged multi-tile batch (auto tile -> 2 grid steps).
    check(300, jax.random.PRNGKey(2))
    # Fused gather, larger batch exercising the auto tile sizing (2 x 1024).
    check(2048, jax.random.PRNGKey(3))
    # Fallback path: XLA gather from pre-transposed tables, stacked stream.
    check(300, jax.random.PRNGKey(4), use_fused=False)
    # Explicit batch_tile override (3 grid steps, fused path).
    check(300, jax.random.PRNGKey(5), batch_tile=128)

    print("KERNEL_OK")
</pallas_src>

<mosaic_0001>
module attributes {stable_mosaic.version = 11 : i64} {
  func.func @_transh_fused_kernel(%arg0: i32, %arg1: memref<3x128xi32, #tpu.memory_space<vmem>>, %arg2: memref<32x16xf32, #tpu.memory_space<vmem>>, %arg3: memref<32x8xf32, #tpu.memory_space<vmem>>, %arg4: memref<1x128xf32, #tpu.memory_space<vmem>>) attributes {dimension_semantics = [#tpu.dimension_semantics<parallel>], iteration_bounds = array<i64: 1>, scalar_prefetch = 0 : i64, scratch_operands = 0 : i64, tpu.core_type = #tpu.core_type<tc>, window_params = [{transform_indices = @transform_0, window_bounds = array<i64: 3, 128>}, {pipeline_mode = #tpu.pipeline_mode<synchronous>, transform_indices = @transform_1, window_bounds = array<i64: 32, 16>}, {pipeline_mode = #tpu.pipeline_mode<synchronous>, transform_indices = @transform_2, window_bounds = array<i64: 32, 8>}, {transform_indices = @transform_3, window_bounds = array<i64: 1, 128>}]} {
    %c0 = arith.constant 0 : index
    %c0_0 = arith.constant 0 : index
    %0 = vector.load %arg2[%c0, %c0_0] : memref<32x16xf32, #tpu.memory_space<vmem>>, vector<32x16xf32>
    %c0_1 = arith.constant 0 : index
    %c0_2 = arith.constant 0 : index
    %1 = vector.load %arg3[%c0_1, %c0_2] : memref<32x8xf32, #tpu.memory_space<vmem>>, vector<32x8xf32>
    %c0_3 = arith.constant 0 : index
    %c0_4 = arith.constant 0 : index
    %2 = vector.load %arg1[%c0_3, %c0_4] : memref<3x128xi32, #tpu.memory_space<vmem>>, vector<1x128xi32>
    %3 = tpu.iota {dimensions = array<i32: 0>} : vector<16x128xi32>
    %4 = vector.broadcast %2 : vector<1x128xi32> to vector<16x128xi32>
    %5 = arith.cmpi eq, %3, %4 : vector<16x128xi32>
    %6 = arith.extui %5 : vector<16x128xi1> to vector<16x128xi32>
    %7 = arith.sitofp %6 : vector<16x128xi32> to vector<16x128xf32>
    %cst = arith.constant dense<0.000000e+00> : vector<32x128xf32>
    %8 = tpu.matmul %0, %7, %cst {dimension_numbers = #tpu.dot_dimension_numbers<[1], [0], [0], [1], [0, 0, 1, 1], [], []>} : vector<32x16xf32>, vector<16x128xf32>, vector<32x128xf32> -> vector<32x128xf32>
    %c1 = arith.constant 1 : index
    %c0_5 = arith.constant 0 : index
    %9 = vector.load %arg1[%c1, %c0_5] : memref<3x128xi32, #tpu.memory_space<vmem>>, vector<1x128xi32>
    %10 = tpu.iota {dimensions = array<i32: 0>} : vector<8x128xi32>
    %11 = vector.broadcast %9 : vector<1x128xi32> to vector<8x128xi32>
    %12 = arith.cmpi eq, %10, %11 : vector<8x128xi32>
    %13 = arith.extui %12 : vector<8x128xi1> to vector<8x128xi32>
    %14 = arith.sitofp %13 : vector<8x128xi32> to vector<8x128xf32>
    %cst_6 = arith.constant dense<0.000000e+00> : vector<32x128xf32>
    %15 = tpu.matmul %1, %14, %cst_6 {dimension_numbers = #tpu.dot_dimension_numbers<[1], [0], [0], [1], [0, 0, 1, 1], [], []>} : vector<32x8xf32>, vector<8x128xf32>, vector<32x128xf32> -> vector<32x128xf32>
    %c2 = arith.constant 2 : index
    %c0_7 = arith.constant 0 : index
    %16 = vector.load %arg1[%c2, %c0_7] : memref<3x128xi32, #tpu.memory_space<vmem>>, vector<1x128xi32>
    %17 = tpu.iota {dimensions = array<i32: 0>} : vector<16x128xi32>
    %18 = vector.broadcast %16 : vector<1x128xi32> to vector<16x128xi32>
    %19 = arith.cmpi eq, %17, %18 : vector<16x128xi32>
    %20 = arith.extui %19 : vector<16x128xi1> to vector<16x128xi32>
    %21 = arith.sitofp %20 : vector<16x128xi32> to vector<16x128xf32>
    %cst_8 = arith.constant dense<0.000000e+00> : vector<32x128xf32>
    %22 = tpu.matmul %0, %21, %cst_8 {dimension_numbers = #tpu.dot_dimension_numbers<[1], [0], [0], [1], [0, 0, 1, 1], [], []>} : vector<32x16xf32>, vector<16x128xf32>, vector<32x128xf32> -> vector<32x128xf32>
    %23 = arith.mulf %8, %8 : vector<32x128xf32>
    %cst_9 = arith.constant dense<0.000000e+00> : vector<128xf32>
    %24 = vector.multi_reduction <add>, %23, %cst_9 [0] : vector<32x128xf32> to vector<128xf32>
    %25 = vector.shape_cast %24 : vector<128xf32> to vector<1x128xf32>
    %cst_10 = arith.constant 1.000000e+00 : f32
    %26 = vector.broadcast %cst_10 : f32 to vector<1x128xf32>
    %27 = arith.cmpf ogt, %25, %26 : vector<1x128xf32>
    %28 = math.rsqrt %25 : vector<1x128xf32>
    %cst_11 = arith.constant 1.000000e+00 : f32
    %29 = vector.broadcast %cst_11 : f32 to vector<1x128xf32>
    %30 = arith.select %27, %28, %29 : vector<1x128xi1>, vector<1x128xf32>
    %31 = vector.broadcast %30 : vector<1x128xf32> to vector<32x128xf32>
    %32 = arith.mulf %8, %31 : vector<32x128xf32>
    %33 = arith.mulf %22, %22 : vector<32x128xf32>
    %cst_12 = arith.constant dense<0.000000e+00> : vector<128xf32>
    %34 = vector.multi_reduction <add>, %33, %cst_12 [0] : vector<32x128xf32> to vector<128xf32>
    %35 = vector.shape_cast %34 : vector<128xf32> to vector<1x128xf32>
    %cst_13 = arith.constant 1.000000e+00 : f32
    %36 = vector.broadcast %cst_13 : f32 to vector<1x128xf32>
    %37 = arith.cmpf ogt, %35, %36 : vector<1x128xf32>
    %38 = math.rsqrt %35 : vector<1x128xf32>
    %cst_14 = arith.constant 1.000000e+00 : f32
    %39 = vector.broadcast %cst_14 : f32 to vector<1x128xf32>
    %40 = arith.select %37, %38, %39 : vector<1x128xi1>, vector<1x128xf32>
    %41 = vector.broadcast %40 : vector<1x128xf32> to vector<32x128xf32>
    %42 = arith.mulf %22, %41 : vector<32x128xf32>
    %43 = arith.subf %32, %42 : vector<32x128xf32>
    %44 = arith.mulf %43, %15 : vector<32x128xf32>
    %cst_15 = arith.constant dense<0.000000e+00> : vector<128xf32>
    %45 = vector.multi_reduction <add>, %44, %cst_15 [0] : vector<32x128xf32> to vector<128xf32>
    %46 = vector.shape_cast %45 : vector<128xf32> to vector<1x128xf32>
    %cst_16 = arith.constant 1.000000e+00 : f32
    %47 = vector.broadcast %cst_16 : f32 to vector<1x128xf32>
    %48 = arith.subf %47, %46 : vector<1x128xf32>
    %49 = vector.broadcast %48 : vector<1x128xf32> to vector<32x128xf32>
    %50 = arith.mulf %15, %49 : vector<32x128xf32>
    %51 = arith.addf %43, %50 : vector<32x128xf32>
    %52 = arith.mulf %51, %51 : vector<32x128xf32>
    %cst_17 = arith.constant dense<0.000000e+00> : vector<128xf32>
    %53 = vector.multi_reduction <add>, %52, %cst_17 [0] : vector<32x128xf32> to vector<128xf32>
    %54 = vector.shape_cast %53 : vector<128xf32> to vector<1x128xf32>
    %55 = math.sqrt %54 : vector<1x128xf32>
    %c0_18 = arith.constant 0 : index
    %c0_19 = arith.constant 0 : index
    %56 = vector.load %arg4[%c0_18, %c0_19] : memref<1x128xf32, #tpu.memory_space<vmem>>, vector<1x128xf32>
    tpu.vector_store %arg4[%c0_18, %c0_19], %55 {strides = array<i32>} : memref<1x128xf32, #tpu.memory_space<vmem>>, vector<1x128xf32>,
    return
  }
  func.func @transform_0(%arg0: i32) -> (i32, i32) {
    %c0_i32 = arith.constant 0 : i32
    %c0_i32_0 = arith.constant 0 : i32
    return %c0_i32, %arg0 : i32, i32
  }
  func.func @transform_1(%arg0: i32) -> (i32, i32) {
    %c0_i32 = arith.constant 0 : i32
    %c0_i32_0 = arith.constant 0 : i32
    %c0_i32_1 = arith.constant 0 : i32
    return %c0_i32, %c0_i32_0 : i32, i32
  }
  func.func @transform_2(%arg0: i32) -> (i32, i32) {
    %c0_i32 = arith.constant 0 : i32
    %c0_i32_0 = arith.constant 0 : i32
    %c0_i32_1 = arith.constant 0 : i32
    return %c0_i32, %c0_i32_0 : i32, i32
  }
  func.func @transform_3(%arg0: i32) -> (i32, i32) {
    %c0_i32 = arith.constant 0 : i32
    %c0_i32_0 = arith.constant 0 : i32
    return %c0_i32, %arg0 : i32, i32
  }
}

</mosaic_0001>

<llo_original>
// kernel: tpu_custom_call.1
$region0: #{tpu_custom_call.1}
  #allocation0 [shape = 'u32[]', space=smem, size = 0x4, offset = 0x4, fixed_abs, tag = 'smem constant byte address 0x4 - core index']
  #allocation1 [shape = 'u32[72,128]{1,0:T(1,128)}', space=vmem, size = 0x9000, scoped, tag = 'internal scratch']
  %s0 = inlined_call_operand.vmem [shape: s32[3,128], index: 0, kind: input, shape index: {}]
  %s1 = inlined_call_operand.vmem [shape: f32[32,16], index: 1, kind: input, shape index: {}]
  %s2 = inlined_call_operand.vmem [shape: f32[32,8], index: 2, kind: input, shape index: {}]
  %s3 = inlined_call_operand.hbm [shape: f32[1,128], index: 3, kind: output, shape index: {}]
  %s4 = sld [smem:[#allocation0]]
  $region22: #{tpu_custom_call.1} parent=0
    _
  %s6 = ssub.s32 1, %s4
  %s7 = scalar_select 0, %s6, %s4
  $region1: #{tpu_custom_call.1} parent=0
    #allocation2 [shape = 'u8[512]{0}', space=vmem, size = 0x400, scoped, tag = 'output window, operand 0, single buffered']
    #allocation3 [shape = 's32[1]{0}', space=sflag, size = 0x4, scoped, tag = 'scoped memory for tpu_custom_call.1']
    %8 = vsyncpa [#allocation3], 0
    // Predicated region
    $region2: #{tpu_custom_call.1} parent=1 // pred_check
      _
    $region3: #{tpu_custom_call.1} parent=1 // pred_check_branch
      %10 = sbr.rel (0) target = $region5
    $region4: #{tpu_custom_call.1} parent=1 // pred_region
      _
    $region5: #{tpu_custom_call.1} parent=1 // pred_fallthru
      _
    // Predicated region
    $region6: #{tpu_custom_call.1} parent=1 // pred_check
      _
    $region7: #{tpu_custom_call.1} parent=1 // pred_check_branch
      %12 = sbr.rel (0) target = $region9
    $region8: #{tpu_custom_call.1} parent=1 // pred_region
      _
    $region9: #{tpu_custom_call.1} parent=1 // pred_fallthru
      _
    // Predicated region
    $region10: #{tpu_custom_call.1} parent=1 // pred_check
      _
    $region11: #{tpu_custom_call.1} parent=1 // pred_check_branch
      %14 = sbr.rel (0) target = $region13
    $region12: #{tpu_custom_call.1} parent=1 // pred_region
      _
    $region13: #{tpu_custom_call.1} parent=1 // pred_fallthru
      _
    %v15 = vld [vmem:[%s1] sm:$0xff]
    %v16 = vld [vmem:[%s1 + $0x8] sm:$0xff]
    %v17 = vld [vmem:[%s1 + $0x10] sm:$0xff]
    %v18 = vld [vmem:[%s1 + $0x18] sm:$0xff]
    %v19 = vld [vmem:[%s2] sm:$0xff]
    %v20 = vld [vmem:[%s2 + $0x8] sm:$0xff]
    %v21 = vld [vmem:[%s2 + $0x10] sm:$0xff]
    %v22 = vld [vmem:[%s2 + $0x18] sm:$0xff]
    %v23 = vld [vmem:[%s0] sm:$0x1]
    %v24 = vlaneseq
    %v25 = vshrl.u32 %v24, 7
    %v26 = vadd.s32 %v25, 8
    %v27 = vperm.slane %v23, 0
    %vm28 = vcmp.eq.s32.totalorder %v25, %v27
    %vm29 = vcmp.eq.s32.totalorder %v26, %v27
    %v30 = vsel %vm28, 1, 0
    %v31 = vsel %vm29, 1, 0
    %v32 = vcvt.s32.f32 %v30
    %v33 = vcvt.s32.f32 %v31
    %vm34 = vcmask 130048
    %v36 = vsel %vm34, %v15, 0
    %v39 = vsel %vm34, %v16, 0
    %v42 = vsel %vm34, %v17, 0
    %v45 = vsel %vm34, %v18, 0
    %47 = vmatpush.msra.mxu0 0.0
    %48 = vmatpush.msra.mxu0 0.0
    %49 = vmatpush.msra.mxu0 0.0
    %50 = vmatpush.msra.mxu0 0.0
    %51 = vmatpush.msra.mxu0 0.0
    %52 = vmatpush.msra.mxu0 0.0
    %53 = vmatpush.msra.mxu0 0.0
    %54 = vmatpush.msra.mxu0 0.0
    %55 = vmatpush.msra.mxu0 0.0
    %56 = vmatpush.msra.mxu0 0.0
    %57 = vmatpush.msra.mxu0 0.0
    %58 = vmatpush.msra.mxu0 0.0
    %59 = vmatpush.msra.mxu0 0.0
    %60 = vmatpush.msra.mxu0 0.0
    %61 = vmatpush.msra.mxu0 %v33
    %62 = vmatpush.msra.mxu0 %v32
    %63 = vmatmul.f32.gmra.mxu0 %v36
    %v64 = vpop.f32.mrf.mxu0
    %v65 = vadd.f32 0.0, %v64
    %66 = vmatmul.f32.gmra.mxu0 %v39
    %v67 = vpop.f32.mrf.mxu0
    %v68 = vadd.f32 0.0, %v67
    %69 = vmatmul.f32.gmra.mxu0 %v42
    %v70 = vpop.f32.mrf.mxu0
    %v71 = vadd.f32 0.0, %v70
    %72 = vmatmul.f32.gmra.mxu0 %v45
    %v73 = vpop.f32.mrf.mxu0
    %v74 = vadd.f32 0.0, %v73
    %75 = vdwg.mxu0
    %v76 = vld [vmem:[%s0 + $0x1] sm:$0x1]
    %v77 = vperm.slane %v76, 0
    %vm78 = vcmp.eq.s32.totalorder %v25, %v77
    %v79 = vsel %vm78, 1, 0
    %v80 = vcvt.s32.f32 %v79
    %vm81 = vcmask 64512
    %v83 = vsel %vm81, %v19, 0
    %v86 = vsel %vm81, %v20, 0
    %v89 = vsel %vm81, %v21, 0
    %v92 = vsel %vm81, %v22, 0
    %94 = vmatpush.msra.mxu0 0.0
    %95 = vmatpush.msra.mxu0 0.0
    %96 = vmatpush.msra.mxu0 0.0
    %97 = vmatpush.msra.mxu0 0.0
    %98 = vmatpush.msra.mxu0 0.0
    %99 = vmatpush.msra.mxu0 0.0
    %100 = vmatpush.msra.mxu0 0.0
    %101 = vmatpush.msra.mxu0 0.0
    %102 = vmatpush.msra.mxu0 0.0
    %103 = vmatpush.msra.mxu0 0.0
    %104 = vmatpush.msra.mxu0 0.0
    %105 = vmatpush.msra.mxu0 0.0
    %106 = vmatpush.msra.mxu0 0.0
    %107 = vmatpush.msra.mxu0 0.0
    %108 = vmatpush.msra.mxu0 0.0
    %109 = vmatpush.msra.mxu0 %v80
    %110 = vmatmul.f32.gmra.mxu0 %v83
    %v111 = vpop.f32.mrf.mxu0
    %v112 = vadd.f32 0.0, %v111
    %113 = vmatmul.f32.gmra.mxu0 %v86
    %v114 = vpop.f32.mrf.mxu0
    %v115 = vadd.f32 0.0, %v114
    %116 = vmatmul.f32.gmra.mxu0 %v89
    %v117 = vpop.f32.mrf.mxu0
    %v118 = vadd.f32 0.0, %v117
    %119 = vmatmul.f32.gmra.mxu0 %v92
    %v120 = vpop.f32.mrf.mxu0
    %v121 = vadd.f32 0.0, %v120
    %122 = vdwg.mxu0
    %v123 = vld [vmem:[%s0 + $0x2] sm:$0x1]
    %v124 = vperm.slane %v123, 0
    %vm125 = vcmp.eq.s32.totalorder %v25, %v124
    %vm126 = vcmp.eq.s32.totalorder %v26, %v124
    %v127 = vsel %vm125, 1, 0
    %v128 = vsel %vm126, 1, 0
    %v129 = vcvt.s32.f32 %v127
    %v130 = vcvt.s32.f32 %v128
    %131 = vmatpush.msra.mxu0 0.0
    %132 = vmatpush.msra.mxu0 0.0
    %133 = vmatpush.msra.mxu0 0.0
    %134 = vmatpush.msra.mxu0 0.0
    %135 = vmatpush.msra.mxu0 0.0
    %136 = vmatpush.msra.mxu0 0.0
    %137 = vmatpush.msra.mxu0 0.0
    %138 = vmatpush.msra.mxu0 0.0
    %139 = vmatpush.msra.mxu0 0.0
    %140 = vmatpush.msra.mxu0 0.0
    %141 = vmatpush.msra.mxu0 0.0
    %142 = vmatpush.msra.mxu0 0.0
    %143 = vmatpush.msra.mxu0 0.0
    %144 = vmatpush.msra.mxu0 0.0
    %145 = vmatpush.msra.mxu0 %v130
    %146 = vmatpush.msra.mxu0 %v129
    %147 = vmatmul.f32.gmra.mxu0 %v36
    %v148 = vpop.f32.mrf.mxu0
    %v149 = vadd.f32 0.0, %v148
    %150 = vmatmul.f32.gmra.mxu0 %v39
    %v151 = vpop.f32.mrf.mxu0
    %v152 = vadd.f32 0.0, %v151
    %153 = vmatmul.f32.gmra.mxu0 %v42
    %v154 = vpop.f32.mrf.mxu0
    %v155 = vadd.f32 0.0, %v154
    %156 = vmatmul.f32.gmra.mxu0 %v45
    %v157 = vpop.f32.mrf.mxu0
    %v158 = vadd.f32 0.0, %v157
    %159 = vdwg.mxu0
    %v160 = vmul.f32 %v65, %v65
    %v161 = vmul.f32 %v68, %v68
    %v162 = vmul.f32 %v71, %v71
    %v163 = vmul.f32 %v74, %v74
    %v164 = vadd.f32 %v160, %v161
    %v165 = vadd.f32 %v164, %v162
    %v166 = vadd.f32 %v165, %v163
    %v167 = vrot.slane %v166, 4
    %v168 = vadd.f32 %v166, %v167
    %v169 = vrot.slane %v168, 2
    %v170 = vadd.f32 %v168, %v169
    %v171 = vrot.slane %v170, 1
    %v172 = vadd.f32 %v170, %v171
    %vm173 = vcmp.gt.f32.partialorder %v172, 1.0
    %v174 = vrsqrt.pop %v172
    %v175 = vmul.f32 %v174, %v172
    %v176 = vmul.f32 %v175, %v174
    %v177 = vmul.f32 0.5, %v176
    %v178 = vsub.f32 1.5, %v177
    %v179 = vmul.f32 %v174, %v178
    %vm180 = vweird.f32 %v172
    %vm181 = vweird.f32 %v174
    %vm182 = vmor %vm180, %vm181
    %v183 = vsel %vm182, %v174, %v179
    %v184 = vsel %vm173, %v183, 1.0
    %v185 = vmul.f32 %v65, %v184
    %v186 = vmul.f32 %v68, %v184
    %v187 = vmul.f32 %v71, %v184
    %v188 = vmul.f32 %v74, %v184
    %v189 = vmul.f32 %v149, %v149
    %v190 = vmul.f32 %v152, %v152
    %v191 = vmul.f32 %v155, %v155
    %v192 = vmul.f32 %v158, %v158
    %v193 = vadd.f32 %v189, %v190
    %v194 = vadd.f32 %v193, %v191
    %v195 = vadd.f32 %v194, %v192
    %v196 = vrot.slane %v195, 4
    %v197 = vadd.f32 %v195, %v196
    %v198 = vrot.slane %v197, 2
    %v199 = vadd.f32 %v197, %v198
    %v200 = vrot.slane %v199, 1
    %v201 = vadd.f32 %v199, %v200
    %vm202 = vcmp.gt.f32.partialorder %v201, 1.0
    %v203 = vrsqrt.pop %v201
    %v204 = vmul.f32 %v203, %v201
    %v205 = vmul.f32 %v204, %v203
    %v206 = vmul.f32 0.5, %v205
    %v207 = vsub.f32 1.5, %v206
    %v208 = vmul.f32 %v203, %v207
    %vm209 = vweird.f32 %v201
    %vm210 = vweird.f32 %v203
    %vm211 = vmor %vm209, %vm210
    %v212 = vsel %vm211, %v203, %v208
    %v213 = vsel %vm202, %v212, 1.0
    %v214 = vmul.f32 %v149, %v213
    %v215 = vmul.f32 %v152, %v213
    %v216 = vmul.f32 %v155, %v213
    %v217 = vmul.f32 %v158, %v213
    %v218 = vsub.f32 %v185, %v214
    %v219 = vsub.f32 %v186, %v215
    %v220 = vsub.f32 %v187, %v216
    %v221 = vsub.f32 %v188, %v217
    %v222 = vmul.f32 %v218, %v112
    %v223 = vmul.f32 %v219, %v115
    %v224 = vmul.f32 %v220, %v118
    %v225 = vmul.f32 %v221, %v121
    %v226 = vadd.f32 %v222, %v223
    %v227 = vadd.f32 %v226, %v224
    %v228 = vadd.f32 %v227, %v225
    %v229 = vrot.slane %v228, 4
    %v230 = vadd.f32 %v228, %v229
    %v231 = vrot.slane %v230, 2
    %v232 = vadd.f32 %v230, %v231
    %v233 = vrot.slane %v232, 1
    %v234 = vadd.f32 %v232, %v233
    %v235 = vsub.f32 1.0, %v234
    %v236 = vmul.f32 %v112, %v235
    %v237 = vmul.f32 %v115, %v235
    %v238 = vmul.f32 %v118, %v235
    %v239 = vmul.f32 %v121, %v235
    %v240 = vadd.f32 %v218, %v236
    %v241 = vadd.f32 %v219, %v237
    %v242 = vadd.f32 %v220, %v238
    %v243 = vadd.f32 %v221, %v239
    %v244 = vmul.f32 %v240, %v240
    %v245 = vmul.f32 %v241, %v241
    %v246 = vmul.f32 %v242, %v242
    %v247 = vmul.f32 %v243, %v243
    %v248 = vadd.f32 %v244, %v245
    %v249 = vadd.f32 %v248, %v246
    %v250 = vadd.f32 %v249, %v247
    %v251 = vrot.slane %v250, 4
    %v252 = vadd.f32 %v250, %v251
    %v253 = vrot.slane %v252, 2
    %v254 = vadd.f32 %v252, %v253
    %v255 = vrot.slane %v254, 1
    %v256 = vadd.f32 %v254, %v255
    %v257 = vrsqrt.pop %v256
    %v258 = vmul.f32 %v257, %v256
    %v259 = vmul.f32 %v258, %v257
    %v260 = vmul.f32 0.5, %v259
    %v261 = vsub.f32 1.5, %v260
    %v262 = vmul.f32 %v257, %v261
    %v263 = vmul.f32 %v256, %v262
    %vm264 = vcmp.eq.f32.partialorder %v256, inf
    %v265 = vsel %vm264, %v256, %v263
    %vm266 = vcmp.eq.f32.partialorder %v256, 0.0
    %v267 = vand.u32 %v256, 2147483648
    %v268 = vsel %vm266, %v267, %v265
    %269 = vst [vmem:[#allocation2] sm:$0x1] %v268
    // Predicated region
    $region14: #{tpu_custom_call.1} parent=1 // pred_check
      _
    $region15: #{tpu_custom_call.1} parent=1 // pred_check_branch
      %271 = sbr.rel (0) target = $region17
    $region16: #{tpu_custom_call.1} parent=1 // pred_region
      %273 = vsyncadd [#allocation3], 0
      %s275 = sshll.u32 [#allocation2], 4
      %s276 = int_to_ptr.vmem [resolvable:$true] %s275
      %s277 = sshll.u32 %s3, 4
      %s278 = int_to_ptr.hbm [resolvable:$true] %s277
      %280 = dma.vmem_to_hbm [thread:$0]  %s276, 16, %s278, [#allocation3]
    $region17: #{tpu_custom_call.1} parent=1 // pred_fallthru
      _
    // Predicated region
    $region18: #{tpu_custom_call.1} parent=1 // pred_check
      _
    $region19: #{tpu_custom_call.1} parent=1 // pred_check_branch
      %282 = sbr.rel (0) target = $region21
    $region20: #{tpu_custom_call.1} parent=1 // pred_region
      %284 = dma.done [#allocation3], 16
    $region21: #{tpu_custom_call.1} parent=1 // pred_fallthru
      _
    %285 = vsyncpa [#allocation3], 1

</llo_original>
